<compile_context>
chip_gen: v6e
topology: v6e:2x2x1
jax: 0.10.0
libtpu: 0.0.40
codegen_flags: <defaults>
</compile_context>

<pallas_src>
import jax
import jax.numpy as jnp
from jax.experimental import pallas as pl
from jax.experimental.pallas import tpu as pltpu

_LANE = 128
_SUBLANE = 8


def _round_up(n, m):
    return ((n + m - 1) // m) * m


def _vmem_ceiling_bytes():
    """Physical-VMEM-aware cap for the scoped-VMEM hint (leave headroom)."""
    try:
        info = pltpu.get_tpu_info()
        cap = int(getattr(info, "vmem_capacity_bytes", 0) or 0)
        if cap > 0:
            return max(cap - (16 << 20), 32 << 20)
    except Exception:
        pass
    # Conservative fallback: valid on v5e/v6e (128 MiB) and v7x (64 MiB).
    return 48 << 20


def _choose_batch_tile(B, max_tile):
    """Pick the batch tile.

    * tiny B  -> single sublane-aligned tile (one grid step, no padding waste)
    * larger B -> tiles that are multiples of 128 (lane-dense output stores),
      capped at `max_tile`, with an even tile count so the "parallel" batch
      axis balances across v7x's two TensorCores.
    """
    max_tile = max(_LANE, _round_up(max_tile, _LANE))
    if B <= 2 * _LANE:
        return _round_up(B, _SUBLANE)
    nt = pl.cdiv(B, max_tile)
    nt = max(2, nt + (nt % 2))                      # even tile count
    return min(max_tile, _round_up(pl.cdiv(B, nt), _LANE))


def _mlp_kernel(x_ref, w1_ref, b1_ref, w2_ref, b2_ref, w3_ref, b3_ref, o_ref):
    """Fused 3-layer MLP forward for one batch tile.

    x:  (TB, D_in) f32      w1: (D_in, H1) bf16   b1: (1, H1) f32
    h1: (TB, H1)            w2: (H1,  H2)  bf16   b2: (1, H2) f32
    h2: (TB, H2)  f32       w3: (1,   H2)  f32    b3: (1, 1)  f32
    o:  (1, TB)   f32   (batch-major along lanes -> unmasked lane-dense store)
    """
    cd = w1_ref.dtype  # MXU operand dtype (bf16); accumulation / epilogue in f32
    x = x_ref[...].astype(cd)

    # Layer 1: Linear + ReLU (Dropout = identity in eval).
    h1 = jnp.dot(x, w1_ref[...], preferred_element_type=jnp.float32) + b1_ref[...]
    h1 = jnp.maximum(h1, 0.0).astype(cd)

    # Layer 2: Linear + ReLU (Dropout = identity in eval).
    h2 = jnp.dot(h1, w2_ref[...], preferred_element_type=jnp.float32) + b2_ref[...]
    h2 = jnp.maximum(h2, 0.0)  # stays f32 for the VPU output stage

    # Output layer (d_out == 1): VPU multiply + lane reduction (no padded MXU
    # matmul, no (TB, 128) intermediate); result lands batch-major along lanes.
    col = jnp.sum(h2 * w3_ref[...], axis=-1)                 # (TB,)
    o_ref[...] = (col[None, :] + b3_ref[...]).astype(o_ref.dtype)


def prepare_params(params, compute_dtype=jnp.bfloat16):
    """One-time weight prep (hoisted out of the hot path):
      * transpose PyTorch (out, in) weights -> (in, out) for layers 1-2
      * cast MXU operands to `compute_dtype` (bf16 fast path)
      * final layer kept as an f32 row vector (VPU reduce path), no lane padding
      * biases kept in f32, shaped (1, N)
    """
    w1, b1, w2, b2, w3, b3 = params
    d_out = w3.shape[0]
    assert d_out == 1, "kernel specializes the module default output_dim=1"

    w1t = jnp.asarray(w1).T.astype(compute_dtype)            # (d_in, h1)
    w2t = jnp.asarray(w2).T.astype(compute_dtype)            # (h1, h2)
    w3r = jnp.asarray(w3, jnp.float32).reshape(1, -1)        # (1, h2)

    b1r = jnp.asarray(b1, jnp.float32)[None, :]               # (1, h1)
    b2r = jnp.asarray(b2, jnp.float32)[None, :]               # (1, h2)
    b3r = jnp.asarray(b3, jnp.float32).reshape(1, 1)          # (1, 1)

    return (w1t, b1r, w2t, b2r, w3r, b3r, d_out)


def mlp_forward(x, prepared, *, batch_tile=4096):
    """Run the fused MLP kernel. x: (B, D_in) float32 (or bfloat16)."""
    if x.ndim == 1:  # mirror PyTorch: 1-D input -> add batch dim
        x = x[None, :]
    w1t, b1r, w2t, b2r, w3r, b3r, d_out = prepared

    B, d_in = x.shape
    h1 = w1t.shape[1]
    h2 = w2t.shape[1]

    tb = _choose_batch_tile(B, batch_tile)
    grid_n = pl.cdiv(B, tb)
    b_pad = grid_n * tb

    full = lambda i: (0, 0)  # weights/biases: same VMEM-resident block each step

    # VMEM budget hint (corrected): x tile is lane-padded 32->128 in VMEM, the
    # (1, tb) out tile sublane-pads to 8 rows, intermediates at lane-padded
    # widths; weights double-buffered by the pipeline even though constant.
    d_in_p = _round_up(d_in, _LANE)
    h1_p = _round_up(h1, _LANE)
    h2_p = _round_up(h2, _LANE)
    io_bytes = 2 * (tb * d_in_p * x.dtype.itemsize) + 2 * (_SUBLANE * tb * 4)
    w_bytes = 2 * sum(int(a.size) * a.dtype.itemsize
                      for a in (w1t, b1r, w2t, b2r, w3r, b3r))
    inter_bytes = tb * (d_in_p * 2 + h1_p * (4 + 2) + h2_p * (4 + 4))
    vmem_limit = int(min(max(io_bytes + w_bytes + inter_bytes + (2 << 20),
                             8 << 20),
                         _vmem_ceiling_bytes()))

    out = pl.pallas_call(
        _mlp_kernel,
        out_shape=jax.ShapeDtypeStruct((1, b_pad), jnp.float32),
        grid_spec=pltpu.PrefetchScalarGridSpec(
            num_scalar_prefetch=0,
            grid=(grid_n,),
            in_specs=[
                pl.BlockSpec((tb, d_in), lambda i: (i, 0)),   # x batch tile
                pl.BlockSpec((d_in, h1), full),               # w1^T (bf16)
                pl.BlockSpec((1, h1), full),                  # b1   (f32)
                pl.BlockSpec((h1, h2), full),                 # w2^T (bf16)
                pl.BlockSpec((1, h2), full),                  # b2   (f32)
                pl.BlockSpec((1, h2), full),                  # w3 row (f32)
                pl.BlockSpec((1, 1), full),                   # b3   (f32)
            ],
            out_specs=pl.BlockSpec((1, tb), lambda i: (0, i)),  # lane-dense out
        ),
        compiler_params=pltpu.CompilerParams(
            dimension_semantics=("parallel",),  # batch axis shards across TCs (v7x)
            vmem_limit_bytes=vmem_limit),
    )(x, w1t, b1r, w2t, b2r, w3r, b3r)

    # (1, B_pad) -> (B, 1); tiny slice (B*4 bytes), no padded-slab re-read.
    return out[0, :B][:, None]


def init_params(key, input_dim, hidden_layers=(64, 32), output_dim=1):
    """Deterministic Kaiming-uniform-ish init matching nn.Linear shapes."""
    dims = [input_dim, *hidden_layers, output_dim]
    params = []
    for i in range(len(dims) - 1):
        fan_in, fan_out = dims[i], dims[i + 1]
        key, kw, kb = jax.random.split(key, 3)
        bound = 1.0 / jnp.sqrt(fan_in)
        w = jax.random.uniform(kw, (fan_out, fan_in), jnp.float32, -bound, bound)
        b = jax.random.uniform(kb, (fan_out,), jnp.float32, -bound, bound)
        params += [w, b]
    return tuple(params)


def mlp_reference(x, params, compute_dtype=jnp.bfloat16):
    """Plain-JAX reference of the PyTorch forward (eval mode), using the same
    precision policy as the kernel (bf16 MXU operands for layers 1-2 with f32
    accumulate; layer 3 fully in f32)."""
    if x.ndim == 1:
        x = x[None, :]
    w1, b1, w2, b2, w3, b3 = params
    cd = compute_dtype
    h = jnp.dot(x.astype(cd), jnp.asarray(w1).T.astype(cd),
                preferred_element_type=jnp.float32) + b1
    h = jnp.maximum(h, 0.0)
    h = jnp.dot(h.astype(cd), jnp.asarray(w2).T.astype(cd),
                preferred_element_type=jnp.float32) + b2
    h = jnp.maximum(h, 0.0)
    return jnp.dot(h, jnp.asarray(w3, jnp.float32).T,
                   preferred_element_type=jnp.float32) + b3


if __name__ == "__main__":
    key = jax.random.PRNGKey(0)
    k_in, k_in2, k_par = jax.random.split(key, 3)

    input_dim = 32
    hidden_layers = (64, 32)
    output_dim = 1

    params = init_params(k_par, input_dim, hidden_layers, output_dim)
    prepared = prepare_params(params)  # hoisted: transpose / bf16 cast once

    # Small batch: single grid step, exact sublane-aligned tile.
    x_small = jax.random.normal(k_in, (8, input_dim), jnp.float32)
    out_small = jax.block_until_ready(mlp_forward(x_small, prepared))
    ref_small = mlp_reference(x_small, params)
    assert out_small.shape == (8, output_dim), out_small.shape
    assert jnp.allclose(out_small, ref_small, atol=5e-3, rtol=5e-3), \
        f"max err {jnp.max(jnp.abs(out_small - ref_small))}"

    # Larger batch: exercises the even 2-tile grid (v7x core balance), 128-row
    # aligned tiles, lane-dense (1, tb) output blocks, and the garbage tail rows
    # being sliced off in the wrapper.
    x_big = jax.random.normal(k_in2, (1030, input_dim), jnp.float32)
    out_big = jax.block_until_ready(mlp_forward(x_big, prepared))
    ref_big = mlp_reference(x_big, params)
    assert out_big.shape == (1030, output_dim), out_big.shape
    assert jnp.allclose(out_big, ref_big, atol=5e-3, rtol=5e-3), \
        f"max err {jnp.max(jnp.abs(out_big - ref_big))}"

    print("KERNEL_OK")
</pallas_src>

<mosaic_0001>
module attributes {stable_mosaic.version = 11 : i64} {
  func.func @_mlp_kernel(%arg0: i32, %arg1: memref<8x32xf32, #tpu.memory_space<vmem>>, %arg2: memref<32x64xbf16, #tpu.memory_space<vmem>>, %arg3: memref<1x64xf32, #tpu.memory_space<vmem>>, %arg4: memref<64x32xbf16, #tpu.memory_space<vmem>>, %arg5: memref<1x32xf32, #tpu.memory_space<vmem>>, %arg6: memref<1x32xf32, #tpu.memory_space<vmem>>, %arg7: memref<1x1xf32, #tpu.memory_space<vmem>>, %arg8: memref<1x8xf32, #tpu.memory_space<vmem>>) attributes {dimension_semantics = [#tpu.dimension_semantics<parallel>], iteration_bounds = array<i64: 1>, scalar_prefetch = 0 : i64, scratch_operands = 0 : i64, tpu.core_type = #tpu.core_type<tc>, window_params = [{transform_indices = @transform_0, window_bounds = array<i64: 8, 32>}, {pipeline_mode = #tpu.pipeline_mode<synchronous>, transform_indices = @transform_1, window_bounds = array<i64: 32, 64>}, {pipeline_mode = #tpu.pipeline_mode<synchronous>, transform_indices = @transform_2, window_bounds = array<i64: 1, 64>}, {pipeline_mode = #tpu.pipeline_mode<synchronous>, transform_indices = @transform_3, window_bounds = array<i64: 64, 32>}, {pipeline_mode = #tpu.pipeline_mode<synchronous>, transform_indices = @transform_4, window_bounds = array<i64: 1, 32>}, {pipeline_mode = #tpu.pipeline_mode<synchronous>, transform_indices = @transform_5, window_bounds = array<i64: 1, 32>}, {pipeline_mode = #tpu.pipeline_mode<synchronous>, transform_indices = @transform_6, window_bounds = array<i64: 1, 1>}, {transform_indices = @transform_7, window_bounds = array<i64: 1, 8>}]} {
    %c0 = arith.constant 0 : index
    %c0_0 = arith.constant 0 : index
    %0 = vector.load %arg1[%c0, %c0_0] : memref<8x32xf32, #tpu.memory_space<vmem>>, vector<8x32xf32>
    %1 = arith.truncf %0 : vector<8x32xf32> to vector<8x32xbf16>
    %c0_1 = arith.constant 0 : index
    %c0_2 = arith.constant 0 : index
    %2 = vector.load %arg2[%c0_1, %c0_2] : memref<32x64xbf16, #tpu.memory_space<vmem>>, vector<32x64xbf16>
    %cst = arith.constant dense<0.000000e+00> : vector<8x64xf32>
    %3 = tpu.matmul %1, %2, %cst {dimension_numbers = #tpu.dot_dimension_numbers<[1], [0], [0], [1], [0, 0, 1, 1], [], []>} : vector<8x32xbf16>, vector<32x64xbf16>, vector<8x64xf32> -> vector<8x64xf32>
    %c0_3 = arith.constant 0 : index
    %c0_4 = arith.constant 0 : index
    %4 = vector.load %arg3[%c0_3, %c0_4] : memref<1x64xf32, #tpu.memory_space<vmem>>, vector<1x64xf32>
    %5 = vector.broadcast %4 : vector<1x64xf32> to vector<8x64xf32>
    %6 = arith.addf %3, %5 : vector<8x64xf32>
    %cst_5 = arith.constant 0.000000e+00 : f32
    %7 = vector.broadcast %cst_5 : f32 to vector<8x64xf32>
    %8 = arith.maximumf %6, %7 : vector<8x64xf32>
    %9 = arith.truncf %8 : vector<8x64xf32> to vector<8x64xbf16>
    %c0_6 = arith.constant 0 : index
    %c0_7 = arith.constant 0 : index
    %10 = vector.load %arg4[%c0_6, %c0_7] : memref<64x32xbf16, #tpu.memory_space<vmem>>, vector<64x32xbf16>
    %cst_8 = arith.constant dense<0.000000e+00> : vector<8x32xf32>
    %11 = tpu.matmul %9, %10, %cst_8 {dimension_numbers = #tpu.dot_dimension_numbers<[1], [0], [0], [1], [0, 0, 1, 1], [], []>} : vector<8x64xbf16>, vector<64x32xbf16>, vector<8x32xf32> -> vector<8x32xf32>
    %c0_9 = arith.constant 0 : index
    %c0_10 = arith.constant 0 : index
    %12 = vector.load %arg5[%c0_9, %c0_10] : memref<1x32xf32, #tpu.memory_space<vmem>>, vector<1x32xf32>
    %13 = vector.broadcast %12 : vector<1x32xf32> to vector<8x32xf32>
    %14 = arith.addf %11, %13 : vector<8x32xf32>
    %cst_11 = arith.constant 0.000000e+00 : f32
    %15 = vector.broadcast %cst_11 : f32 to vector<8x32xf32>
    %16 = arith.maximumf %14, %15 : vector<8x32xf32>
    %c0_12 = arith.constant 0 : index
    %c0_13 = arith.constant 0 : index
    %17 = vector.load %arg6[%c0_12, %c0_13] : memref<1x32xf32, #tpu.memory_space<vmem>>, vector<1x32xf32>
    %18 = vector.broadcast %17 : vector<1x32xf32> to vector<8x32xf32>
    %19 = arith.mulf %16, %18 : vector<8x32xf32>
    %cst_14 = arith.constant dense<0.000000e+00> : vector<8xf32>
    %20 = vector.multi_reduction <add>, %19, %cst_14 [1] : vector<8x32xf32> to vector<8xf32>
    %21 = vector.shape_cast %20 : vector<8xf32> to vector<1x8xf32>
    %c0_15 = arith.constant 0 : index
    %c0_16 = arith.constant 0 : index
    %22 = vector.load %arg7[%c0_15, %c0_16] : memref<1x1xf32, #tpu.memory_space<vmem>>, vector<1x1xf32>
    %23 = vector.broadcast %22 : vector<1x1xf32> to vector<1x8xf32>
    %24 = arith.addf %21, %23 : vector<1x8xf32>
    %c0_17 = arith.constant 0 : index
    %c0_18 = arith.constant 0 : index
    %25 = vector.load %arg8[%c0_17, %c0_18] : memref<1x8xf32, #tpu.memory_space<vmem>>, vector<1x8xf32>
    tpu.vector_store %arg8[%c0_17, %c0_18], %24 {strides = array<i32>} : memref<1x8xf32, #tpu.memory_space<vmem>>, vector<1x8xf32>,
    return
  }
  func.func @transform_0(%arg0: i32) -> (i32, i32) {
    %c0_i32 = arith.constant 0 : i32
    %c0_i32_0 = arith.constant 0 : i32
    return %arg0, %c0_i32 : i32, i32
  }
  func.func @transform_1(%arg0: i32) -> (i32, i32) {
    %c0_i32 = arith.constant 0 : i32
    %c0_i32_0 = arith.constant 0 : i32
    %c0_i32_1 = arith.constant 0 : i32
    return %c0_i32, %c0_i32_0 : i32, i32
  }
  func.func @transform_2(%arg0: i32) -> (i32, i32) {
    %c0_i32 = arith.constant 0 : i32
    %c0_i32_0 = arith.constant 0 : i32
    %c0_i32_1 = arith.constant 0 : i32
    return %c0_i32, %c0_i32_0 : i32, i32
  }
  func.func @transform_3(%arg0: i32) -> (i32, i32) {
    %c0_i32 = arith.constant 0 : i32
    %c0_i32_0 = arith.constant 0 : i32
    %c0_i32_1 = arith.constant 0 : i32
    return %c0_i32, %c0_i32_0 : i32, i32
  }
  func.func @transform_4(%arg0: i32) -> (i32, i32) {
    %c0_i32 = arith.constant 0 : i32
    %c0_i32_0 = arith.constant 0 : i32
    %c0_i32_1 = arith.constant 0 : i32
    return %c0_i32, %c0_i32_0 : i32, i32
  }
  func.func @transform_5(%arg0: i32) -> (i32, i32) {
    %c0_i32 = arith.constant 0 : i32
    %c0_i32_0 = arith.constant 0 : i32
    %c0_i32_1 = arith.constant 0 : i32
    return %c0_i32, %c0_i32_0 : i32, i32
  }
  func.func @transform_6(%arg0: i32) -> (i32, i32) {
    %c0_i32 = arith.constant 0 : i32
    %c0_i32_0 = arith.constant 0 : i32
    %c0_i32_1 = arith.constant 0 : i32
    return %c0_i32, %c0_i32_0 : i32, i32
  }
  func.func @transform_7(%arg0: i32) -> (i32, i32) {
    %c0_i32 = arith.constant 0 : i32
    %c0_i32_0 = arith.constant 0 : i32
    return %c0_i32, %arg0 : i32, i32
  }
}

</mosaic_0001>

<llo_original>
// kernel: tpu_custom_call.1
$region0: #{tpu_custom_call.1}
  #allocation0 [shape = 'u32[]', space=smem, size = 0x4, offset = 0x4, fixed_abs, tag = 'smem constant byte address 0x4 - core index']
  #allocation1 [shape = 'u32[144,128]{1,0:T(1,128)}', space=vmem, size = 0x12000, scoped, tag = 'internal scratch']
  #allocation2 [shape = 'f32[1,1]{1,0:T(1,128)S(1)}', space=vmem, size = 0x200, scoped, tag = 'scoped memory for tpu_custom_call.1']
  %s0 = inlined_call_operand.vmem [shape: f32[8,32], index: 0, kind: input, shape index: {}]
  %s1 = inlined_call_operand.vmem [shape: bf16[32,64], index: 1, kind: input, shape index: {}]
  %s2 = inlined_call_operand.vmem [shape: f32[1,64], index: 2, kind: input, shape index: {}]
  %s3 = inlined_call_operand.vmem [shape: bf16[64,32], index: 3, kind: input, shape index: {}]
  %s4 = inlined_call_operand.vmem [shape: f32[1,32], index: 4, kind: input, shape index: {}]
  %s5 = inlined_call_operand.vmem [shape: f32[1,32], index: 5, kind: input, shape index: {}]
  %s6 = inlined_call_operand.<no memory space> [shape: f32[1,1], index: 6, kind: input, shape index: {}]
  %s7 = inlined_call_operand.hbm [shape: f32[1,8], index: 7, kind: output, shape index: {}]
  %s8 = sld [smem:[#allocation0]]
  $region38: #{tpu_custom_call.1} parent=0
    _
  %s10 = ssub.s32 1, %s8
  %s11 = scalar_select 0, %s10, %s8
  %v12 = vstv %s6
  %13 = vst [vmem:[#allocation2] sm:$0x1] %v12
  $region1: #{tpu_custom_call.1} parent=0
    #allocation3 [shape = 'u8[512]{0}', space=vmem, size = 0x400, scoped, tag = 'output window, operand 0, single buffered']
    #allocation4 [shape = 's32[1]{0}', space=sflag, size = 0x4, scoped, tag = 'scoped memory for tpu_custom_call.1']
    %14 = vsyncpa [#allocation4], 0
    // Predicated region
    $region2: #{tpu_custom_call.1} parent=1 // pred_check
      _
    $region3: #{tpu_custom_call.1} parent=1 // pred_check_branch
      %16 = sbr.rel (0) target = $region5
    $region4: #{tpu_custom_call.1} parent=1 // pred_region
      _
    $region5: #{tpu_custom_call.1} parent=1 // pred_fallthru
      _
    // Predicated region
    $region6: #{tpu_custom_call.1} parent=1 // pred_check
      _
    $region7: #{tpu_custom_call.1} parent=1 // pred_check_branch
      %18 = sbr.rel (0) target = $region9
    $region8: #{tpu_custom_call.1} parent=1 // pred_region
      _
    $region9: #{tpu_custom_call.1} parent=1 // pred_fallthru
      _
    // Predicated region
    $region10: #{tpu_custom_call.1} parent=1 // pred_check
      _
    $region11: #{tpu_custom_call.1} parent=1 // pred_check_branch
      %20 = sbr.rel (0) target = $region13
    $region12: #{tpu_custom_call.1} parent=1 // pred_region
      _
    $region13: #{tpu_custom_call.1} parent=1 // pred_fallthru
      _
    // Predicated region
    $region14: #{tpu_custom_call.1} parent=1 // pred_check
      _
    $region15: #{tpu_custom_call.1} parent=1 // pred_check_branch
      %22 = sbr.rel (0) target = $region17
    $region16: #{tpu_custom_call.1} parent=1 // pred_region
      _
    $region17: #{tpu_custom_call.1} parent=1 // pred_fallthru
      _
    // Predicated region
    $region18: #{tpu_custom_call.1} parent=1 // pred_check
      _
    $region19: #{tpu_custom_call.1} parent=1 // pred_check_branch
      %24 = sbr.rel (0) target = $region21
    $region20: #{tpu_custom_call.1} parent=1 // pred_region
      _
    $region21: #{tpu_custom_call.1} parent=1 // pred_fallthru
      _
    // Predicated region
    $region22: #{tpu_custom_call.1} parent=1 // pred_check
      _
    $region23: #{tpu_custom_call.1} parent=1 // pred_check_branch
      %26 = sbr.rel (0) target = $region25
    $region24: #{tpu_custom_call.1} parent=1 // pred_region
      _
    $region25: #{tpu_custom_call.1} parent=1 // pred_fallthru
      _
    // Predicated region
    $region26: #{tpu_custom_call.1} parent=1 // pred_check
      _
    $region27: #{tpu_custom_call.1} parent=1 // pred_check_branch
      %28 = sbr.rel (0) target = $region29
    $region28: #{tpu_custom_call.1} parent=1 // pred_region
      _
    $region29: #{tpu_custom_call.1} parent=1 // pred_fallthru
      _
    %v30 = vld [vmem:[%s0] sm:$0xff]
    %v31 = vpack.c.bf16 %v30, %v30
    %v32 = vld [vmem:[%s1] sm:$0xf]
    %v33 = vld [vmem:[%s1 + $0x4] sm:$0xf]
    %v34 = vld [vmem:[%s1 + $0x8] sm:$0xf]
    %v35 = vld [vmem:[%s1 + $0xc] sm:$0xf]
    %v36 = vld [vmem:[%s2] sm:$0x1]
    %v38 = vlaneseq
    %v39 = vshrl.u32 %v38, 7
    %v40 = vsub.s32 0, %v39
    %v41 = vrot.slane %v36, %v40
    %v47 = vunpack.c.l.b16 %v32
    %v48 = vunpack.c.l.b16 %v33
    %v49 = vunpack.c.l.b16 %v34
    %v50 = vunpack.c.l.b16 %v35
    %v51 = vpack.c.b16 %v48, %v47
    %v52 = vpack.c.b16 %v50, %v49
    %vm55 = vcmask 261120
    %v57 = vsel %vm55, %v31, 0
    %59 = vmatprep.subr.bf16.mxu0 0
    %60 = vmatpush1.bf16.msra.mxu0 0
    %61 = vmatprep.subr.bf16.mxu0 0
    %62 = vmatpush1.bf16.msra.mxu0 0
    %63 = vmatprep.subr.bf16.mxu0 0
    %64 = vmatpush1.bf16.msra.mxu0 0
    %65 = vmatprep.subr.bf16.mxu0 0
    %66 = vmatpush1.bf16.msra.mxu0 0
    %67 = vmatprep.subr.bf16.mxu0 0
    %68 = vmatpush1.bf16.msra.mxu0 0
    %69 = vmatprep.subr.bf16.mxu0 0
    %70 = vmatpush1.bf16.msra.mxu0 0
    %71 = vmatprep.subr.bf16.mxu0 0
    %72 = vmatpush1.bf16.msra.mxu0 %v52
    %73 = vmatprep.subr.bf16.mxu0 0
    %74 = vmatpush1.bf16.msra.mxu0 %v51
    %75 = vmatprep.subr.bf16.mxu0 0
    %76 = vmatpush2.bf16.msra.mxu0 0
    %77 = vmatprep.subr.bf16.mxu0 0
    %78 = vmatpush2.bf16.msra.mxu0 0
    %79 = vmatprep.subr.bf16.mxu0 0
    %80 = vmatpush2.bf16.msra.mxu0 0
    %81 = vmatprep.subr.bf16.mxu0 0
    %82 = vmatpush2.bf16.msra.mxu0 0
    %83 = vmatprep.subr.bf16.mxu0 0
    %84 = vmatpush2.bf16.msra.mxu0 0
    %85 = vmatprep.subr.bf16.mxu0 0
    %86 = vmatpush2.bf16.msra.mxu0 0
    %87 = vmatprep.subr.bf16.mxu0 0
    %88 = vmatpush2.bf16.msra.mxu0 0
    %89 = vmatprep.subr.bf16.mxu0 0
    %90 = vmatpush2.bf16.msra.mxu0 0
    %91 = vmatprep.mubr.bf16.mxu0 0
    %92 = vmatmul.mubr.bf16.gmra.mxu0 %v57
    %v93 = vpop.f32.mrf.mxu0
    %v94 = vadd.f32 %v41, %v93
    %v95 = vpop.f32.mrf.mxu0
    %v96 = vpop.f32.mrf.mxu0
    %v97 = vpop.f32.mrf.mxu0
    %98 = vdwg.mxu0
    %v99 = vmax.f32 %v94, 0.0
    %v100 = vpack.c.bf16 %v99, %v99
    %v101 = vld [vmem:[%s3] sm:$0xf]
    %v102 = vld [vmem:[%s3 + $0x4] sm:$0xf]
    %v103 = vld [vmem:[%s3 + $0x8] sm:$0xf]
    %v104 = vld [vmem:[%s3 + $0xc] sm:$0xf]
    %v105 = vld [vmem:[%s3 + $0x10] sm:$0xf]
    %v106 = vld [vmem:[%s3 + $0x14] sm:$0xf]
    %v107 = vld [vmem:[%s3 + $0x18] sm:$0xf]
    %v108 = vld [vmem:[%s3 + $0x1c] sm:$0xf]
    %v109 = vld [vmem:[%s4] sm:$0x1]
    %v111 = vlaneseq
    %v112 = vshrl.u32 %v111, 7
    %v113 = vsub.s32 0, %v112
    %v114 = vrot.slane %v109, %v113
    %v124 = vunpack.c.l.b16 %v101
    %v125 = vunpack.c.l.b16 %v102
    %v126 = vunpack.c.l.b16 %v103
    %v127 = vunpack.c.l.b16 %v104
    %v128 = vunpack.c.l.b16 %v105
    %v129 = vunpack.c.l.b16 %v106
    %v130 = vunpack.c.l.b16 %v107
    %v131 = vunpack.c.l.b16 %v108
    %v132 = vpack.c.b16 %v125, %v124
    %v133 = vpack.c.b16 %v127, %v126
    %v134 = vpack.c.b16 %v129, %v128
    %v135 = vpack.c.b16 %v131, %v130
    %vm140 = vcmask 523264
    %v142 = vsel %vm140, %v100, 0
    %144 = vmatprep.subr.bf16.mxu0 0
    %145 = vmatpush1.bf16.msra.mxu0 0
    %146 = vmatprep.subr.bf16.mxu0 0
    %147 = vmatpush1.bf16.msra.mxu0 0
    %148 = vmatprep.subr.bf16.mxu0 0
    %149 = vmatpush1.bf16.msra.mxu0 0
    %150 = vmatprep.subr.bf16.mxu0 0
    %151 = vmatpush1.bf16.msra.mxu0 0
    %152 = vmatprep.subr.bf16.mxu0 0
    %153 = vmatpush1.bf16.msra.mxu0 %v135
    %154 = vmatprep.subr.bf16.mxu0 0
    %155 = vmatpush1.bf16.msra.mxu0 %v134
    %156 = vmatprep.subr.bf16.mxu0 0
    %157 = vmatpush1.bf16.msra.mxu0 %v133
    %158 = vmatprep.subr.bf16.mxu0 0
    %159 = vmatpush1.bf16.msra.mxu0 %v132
    %160 = vmatprep.subr.bf16.mxu0 0
    %161 = vmatpush2.bf16.msra.mxu0 0
    %162 = vmatprep.subr.bf16.mxu0 0
    %163 = vmatpush2.bf16.msra.mxu0 0
    %164 = vmatprep.subr.bf16.mxu0 0
    %165 = vmatpush2.bf16.msra.mxu0 0
    %166 = vmatprep.subr.bf16.mxu0 0
    %167 = vmatpush2.bf16.msra.mxu0 0
    %168 = vmatprep.subr.bf16.mxu0 0
    %169 = vmatpush2.bf16.msra.mxu0 0
    %170 = vmatprep.subr.bf16.mxu0 0
    %171 = vmatpush2.bf16.msra.mxu0 0
    %172 = vmatprep.subr.bf16.mxu0 0
    %173 = vmatpush2.bf16.msra.mxu0 0
    %174 = vmatprep.subr.bf16.mxu0 0
    %175 = vmatpush2.bf16.msra.mxu0 0
    %176 = vmatprep.mubr.bf16.mxu0 0
    %177 = vmatmul.mubr.bf16.gmra.mxu0 %v142
    %v178 = vpop.f32.mrf.mxu0
    %v179 = vadd.f32 %v114, %v178
    %v180 = vpop.f32.mrf.mxu0
    %v181 = vpop.f32.mrf.mxu0
    %v182 = vpop.f32.mrf.mxu0
    %183 = vdwg.mxu0
    %v184 = vmax.f32 %v179, 0.0
    %v185 = vld [vmem:[%s5] sm:$0x1]
    %v187 = vlaneseq
    %v188 = vshrl.u32 %v187, 7
    %v189 = vsub.s32 0, %v188
    %v190 = vrot.slane %v185, %v189
    %v192 = vmul.f32 %v184, %v190
    %v193 = vsel %vm55, %v192, 0.0
    %194 = vadd.xlane.f32.xlu0 %v193
    %v195 = vpop.xlane.xlu0 %194
    %v196 = vld [vmem:[#allocation2] sm:$0x1]
    %198 = vset.pattern.permute.xlu0 0
    %199 = vperm.xlu0 %198, %v196
    %v200 = vpop.permute.xlu0 %199
    %v202 = vlaneseq
    %v203 = vshrl.u32 %v202, 7
    %v204 = vsub.s32 0, %v203
    %v205 = vrot.slane %v200, %v204
    %v206 = vadd.f32 %v195, %v205
    %v208 = vlaneseq
    %v209 = vand.u32 %v208, 127
    %v210 = vlaneseq
    %v211 = vshrl.u32 %v210, 7
    %v212 = vsub.s32 %v209, %v211
    %v213 = vrot.slane %v206, %v212
    %vm215 = vcmask 57344
    %216 = vst.msk [vmem:[#allocation3] sm:$0x1] %vm215, %v213
    // Predicated region
    $region30: #{tpu_custom_call.1} parent=1 // pred_check
      _
    $region31: #{tpu_custom_call.1} parent=1 // pred_check_branch
      %218 = sbr.rel (0) target = $region33
    $region32: #{tpu_custom_call.1} parent=1 // pred_region
      %s220 = ssub.s32 16, 16
      %221 = vsyncadd [#allocation4], %s220
      %s223 = sshll.u32 [#allocation3], 4
      %s224 = int_to_ptr.vmem [resolvable:$true] %s223
      %226 = dma.vmem_to_hbm [thread:$0]  %s224, 16, %s7, [#allocation4]
    $region33: #{tpu_custom_call.1} parent=1 // pred_fallthru
      _
    // Predicated region
    $region34: #{tpu_custom_call.1} parent=1 // pred_check
      _
    $region35: #{tpu_custom_call.1} parent=1 // pred_check_branch
      %228 = sbr.rel (0) target = $region37
    $region36: #{tpu_custom_call.1} parent=1 // pred_region
      %229 = dma.done [#allocation4], 16
    $region37: #{tpu_custom_call.1} parent=1 // pred_fallthru
      _
    %230 = vsyncpa [#allocation4], 1

</llo_original>
